<compile_context>
chip_gen: v5e
topology: v5e:2x2
jax: 0.10.0
libtpu: 0.0.40
codegen_flags: <defaults>
</compile_context>

<pallas_src>
import functools

import jax
import jax.numpy as jnp
from jax.experimental import pallas as pl
from jax.experimental.pallas import tpu as pltpu  # noqa: F401  (TPU backend)

LANES = 128  # lane width; 4*hidden and the padded MLP width both equal this


def _round8(n):
    return ((n + 7) // 8) * 8


def slab_layout(input_size, hidden):
    """Row offsets of each parameter block inside the packed (rows, 128) slab.

    Every block starts on an 8-sublane boundary so in-kernel static slices are
    tile-aligned (no sublane shuffles when loading weights).
    """
    offs = {}
    row = 0
    for name, rows in (("w_ih", input_size), ("w_hh", hidden), ("b_lstm", 1),
                       ("w_fc1", hidden), ("b_fc1", 1),
                       ("w_fc2", LANES), ("b_fc2", 1),
                       ("w_out", LANES), ("b_out", 1)):
        offs[name] = (row, rows)
        row += _round8(rows)
    return offs, row


# ----------------------------------------------------------------------------
# Fused kernel: input projection + unrolled LSTM recurrence + MLP head
# + merged output heads.  No grid: everything fits trivially in VMEM
# (~190 KB slab + a few KB activations).
# ----------------------------------------------------------------------------
def fused_lstm_kernel(x2d_ref, slab_ref, o_ref, *, seq, batch, hidden, offs):
    T, B, H = seq, batch, hidden

    def slab(name):
        r0, rows = offs[name]
        return slab_ref[pl.ds(r0, rows), :]

    # Hoisted input projection: one (T*B, I) @ (I, 4H) matmul (+ combined,
    # gate-scaled bias), removed from the serialized recurrence.
    gates_x = (
        jnp.dot(x2d_ref[...], slab("w_ih"), preferred_element_type=jnp.float32)
        + slab("b_lstm")
    )                                     # (T*B, 4H)

    whh = slab("w_hh")                    # (H, 4H), loaded once outside loop

    h = jnp.zeros((B, H), jnp.float32)
    c = jnp.zeros((B, H), jnp.float32)

    # Fully-unrolled static time loop: only the recurrent matmul + gate math
    # sits on the serial chain.
    for t in range(T):
        gates = gates_x[t * B:(t + 1) * B, :] + jnp.dot(
            h, whh, preferred_element_type=jnp.float32)          # (B, 4H)

        # Single EUP pass over the whole gates vreg.  The i/f/o columns of all
        # LSTM weights/biases were pre-scaled by 0.5 in make_params, so
        # sigmoid(z) = 0.5*(tanh(z/2)+1) is just a VPU fma on the shared tanh.
        tg = jnp.tanh(gates)
        i_g = 0.5 * (tg[:, 0 * H:1 * H] + 1.0)
        f_g = 0.5 * (tg[:, 1 * H:2 * H] + 1.0)
        g_g = tg[:, 2 * H:3 * H]
        o_g = 0.5 * (tg[:, 3 * H:4 * H] + 1.0)

        c = f_g * c + i_g * g_g
        h = o_g * jnp.tanh(c)

    # MLP head (Linear->ReLU->Linear->ReLU) on lstm_out[-1], then the two
    # output linears merged into one lane-padded (128, 128) matmul so the
    # final store is lane-dense.
    h1 = jnp.maximum(
        jnp.dot(h, slab("w_fc1"), preferred_element_type=jnp.float32)
        + slab("b_fc1"), 0.0)
    h2 = jnp.maximum(
        jnp.dot(h1, slab("w_fc2"), preferred_element_type=jnp.float32)
        + slab("b_fc2"), 0.0)
    o_ref[...] = (
        jnp.dot(h2, slab("w_out"), preferred_element_type=jnp.float32)
        + slab("b_out")
    ).astype(o_ref.dtype)


# ----------------------------------------------------------------------------
# Wrapper: free bitcast reshape of x, single fused pallas_call with two input
# DMAs (x, weight slab), slice the two real 3-wide heads back out.
# ----------------------------------------------------------------------------
@functools.partial(jax.jit, static_argnames=("hidden",))
def lstm_model_forward(x, slab, hidden):
    T, B, I = x.shape
    offs, _ = slab_layout(I, hidden)
    kernel = functools.partial(
        fused_lstm_kernel, seq=T, batch=B, hidden=hidden, offs=offs)

    res = pl.pallas_call(
        kernel,
        out_shape=jax.ShapeDtypeStruct((B, LANES), jnp.float32),
    )(x.reshape(T * B, I), slab)

    return res[:, 0:3], res[:, 3:6]


# ----------------------------------------------------------------------------
# Deterministic parameter construction (matches module shapes; init values are
# synthetic uniform, as in PyTorch's default schemes).  Kernel params are
# pre-transposed, gate-scaled, zero-padded, and packed into a single slab; a
# raw PyTorch-layout copy is kept for the pure-JAX reference.
# ----------------------------------------------------------------------------
def make_params(key, input_size, hidden, mid=100, out_dim=3):
    assert 4 * hidden == LANES, "slab packing assumes 4*hidden == 128 lanes"

    def uni(k, shape, bound):
        return jax.random.uniform(k, shape, jnp.float32, -bound, bound)

    ks = jax.random.split(key, 12)
    kH = 1.0 / jnp.sqrt(hidden)
    w_ih = uni(ks[0], (4 * hidden, input_size), kH)   # PyTorch layout (4H, I)
    w_hh = uni(ks[1], (4 * hidden, hidden), kH)       # (4H, H)
    b_ih = uni(ks[2], (4 * hidden,), kH)
    b_hh = uni(ks[3], (4 * hidden,), kH)

    def lin(kw, kb, fan_in, fan_out):
        bound = 1.0 / jnp.sqrt(fan_in)
        return uni(kw, (fan_out, fan_in), bound), uni(kb, (fan_out,), bound)

    w_fc1, b_fc1 = lin(ks[4], ks[5], hidden, mid)
    w_fc2, b_fc2 = lin(ks[6], ks[7], mid, mid)
    w_o0, b_o0 = lin(ks[8], ks[9], mid, out_dim)
    w_o1, b_o1 = lin(ks[10], ks[11], mid, out_dim)

    H = hidden
    # 0.5 on i / f / o gate columns (g stays 1.0) -> single-tanh gate trick.
    gate_scale = jnp.concatenate(
        [jnp.full((H,), 0.5), jnp.full((H,), 0.5),
         jnp.ones((H,)), jnp.full((H,), 0.5)]).astype(jnp.float32)

    pad_m = LANES - mid
    pad_o = LANES - 2 * out_dim

    pieces = {
        # pre-transposed to (in, out) for the kernel, gate-scaled
        "w_ih":   w_ih.T * gate_scale[None, :],                       # (I, 4H)
        "w_hh":   w_hh.T * gate_scale[None, :],                       # (H, 4H)
        "b_lstm": ((b_ih + b_hh) * gate_scale)[None, :],              # (1, 4H)
        # fc1: pad cols to 128 (padded lanes: zero weight + zero bias)
        "w_fc1":  jnp.pad(w_fc1.T, ((0, 0), (0, pad_m))),             # (H, 128)
        "b_fc1":  jnp.pad(b_fc1, (0, pad_m))[None, :],
        # fc2: pad rows & cols to 128 (zero padding keeps real lanes exact)
        "w_fc2":  jnp.pad(w_fc2.T, ((0, pad_m), (0, pad_m))),         # (128,128)
        "b_fc2":  jnp.pad(b_fc2, (0, pad_m))[None, :],
        # merged output heads, padded to 128 output lanes
        "w_out":  jnp.pad(jnp.concatenate([w_o0.T, w_o1.T], axis=1),
                          ((0, pad_m), (0, pad_o))),                  # (128,128)
        "b_out":  jnp.pad(jnp.concatenate([b_o0, b_o1]), (0, pad_o))[None, :],
    }

    offs, total_rows = slab_layout(input_size, hidden)
    slab = jnp.zeros((total_rows, LANES), jnp.float32)
    for name, a in pieces.items():
        r0, rows = offs[name]
        assert a.shape == (rows, LANES)
        slab = slab.at[r0:r0 + rows, :].set(a)

    ref = {"w_ih": w_ih, "w_hh": w_hh, "b_ih": b_ih, "b_hh": b_hh,
           "w_fc1": w_fc1, "b_fc1": b_fc1, "w_fc2": w_fc2, "b_fc2": b_fc2,
           "w_o0": w_o0, "b_o0": b_o0, "w_o1": w_o1, "b_o1": b_o1}
    return slab, ref


def reference_forward(x, ref, hidden):
    T, B, _ = x.shape
    H = hidden

    def step(carry, x_t):
        h, c = carry
        gates = x_t @ ref["w_ih"].T + h @ ref["w_hh"].T + ref["b_ih"] + ref["b_hh"]
        i = jax.nn.sigmoid(gates[:, 0 * H:1 * H])
        f = jax.nn.sigmoid(gates[:, 1 * H:2 * H])
        g = jnp.tanh(gates[:, 2 * H:3 * H])
        o = jax.nn.sigmoid(gates[:, 3 * H:4 * H])
        c = f * c + i * g
        h = o * jnp.tanh(c)
        return (h, c), h

    (h, _), _ = jax.lax.scan(step, (jnp.zeros((B, H)), jnp.zeros((B, H))), x)
    p = jnp.maximum(h @ ref["w_fc1"].T + ref["b_fc1"], 0.0)
    p = jnp.maximum(p @ ref["w_fc2"].T + ref["b_fc2"], 0.0)
    return p @ ref["w_o0"].T + ref["b_o0"], p @ ref["w_o1"].T + ref["b_o1"]


if __name__ == "__main__":
    SEQ, BATCH, INPUT_SIZE, HIDDEN = 8, 2, 4, 32

    key = jax.random.PRNGKey(0)
    k_x, k_p = jax.random.split(key)
    x = jax.random.normal(k_x, (SEQ, BATCH, INPUT_SIZE), dtype=jnp.float32)
    slab, ref = make_params(k_p, INPUT_SIZE, HIDDEN)

    out0, out1 = lstm_model_forward(x, slab, hidden=HIDDEN)
    jax.block_until_ready((out0, out1))

    r0, r1 = reference_forward(x, ref, HIDDEN)
    assert out0.shape == (BATCH, 3) and out1.shape == (BATCH, 3)
    assert jnp.allclose(out0, r0, atol=1e-4, rtol=1e-4)
    assert jnp.allclose(out1, r1, atol=1e-4, rtol=1e-4)

    print("KERNEL_OK")
</pallas_src>

<mosaic_0001>
module attributes {stable_mosaic.version = 11 : i64} {
  func.func @fused_lstm_kernel(%arg0: memref<16x4xf32, #tpu.memory_space<vmem>>, %arg1: memref<360x128xf32, #tpu.memory_space<vmem>>, %arg2: memref<2x128xf32, #tpu.memory_space<vmem>>) attributes {dimension_semantics = [], scalar_prefetch = 0 : i64, scratch_operands = 0 : i64, tpu.core_type = #tpu.core_type<tc>} {
    %c0 = arith.constant 0 : index
    %c0_0 = arith.constant 0 : index
    %0 = vector.load %arg0[%c0, %c0_0] : memref<16x4xf32, #tpu.memory_space<vmem>>, vector<16x4xf32>
    %c0_1 = arith.constant 0 : index
    %c0_2 = arith.constant 0 : index
    %1 = vector.load %arg1[%c0_1, %c0_2] : memref<360x128xf32, #tpu.memory_space<vmem>>, vector<4x128xf32>
    %cst = arith.constant dense<0.000000e+00> : vector<16x128xf32>
    %2 = tpu.matmul %0, %1, %cst {dimension_numbers = #tpu.dot_dimension_numbers<[1], [0], [0], [1], [0, 0, 1, 1], [], []>} : vector<16x4xf32>, vector<4x128xf32>, vector<16x128xf32> -> vector<16x128xf32>
    %c40 = arith.constant 40 : index
    %c0_3 = arith.constant 0 : index
    %3 = vector.load %arg1[%c40, %c0_3] : memref<360x128xf32, #tpu.memory_space<vmem>>, vector<1x128xf32>
    %4 = vector.broadcast %3 : vector<1x128xf32> to vector<16x128xf32>
    %5 = arith.addf %2, %4 : vector<16x128xf32>
    %c8 = arith.constant 8 : index
    %c0_4 = arith.constant 0 : index
    %6 = vector.load %arg1[%c8, %c0_4] : memref<360x128xf32, #tpu.memory_space<vmem>>, vector<32x128xf32>
    %cst_5 = arith.constant 0.000000e+00 : f32
    %7 = vector.broadcast %cst_5 : f32 to vector<2x32xf32>
    %cst_6 = arith.constant 0.000000e+00 : f32
    %8 = vector.broadcast %cst_6 : f32 to vector<2x32xf32>
    %9 = vector.extract_strided_slice %5 {offsets = [0, 0], sizes = [2, 128], strides = [1, 1]} : vector<16x128xf32> to vector<2x128xf32>
    %cst_7 = arith.constant dense<0.000000e+00> : vector<2x128xf32>
    %10 = tpu.matmul %7, %6, %cst_7 {dimension_numbers = #tpu.dot_dimension_numbers<[1], [0], [0], [1], [0, 0, 1, 1], [], []>} : vector<2x32xf32>, vector<32x128xf32>, vector<2x128xf32> -> vector<2x128xf32>
    %11 = arith.addf %9, %10 : vector<2x128xf32>
    %12 = math.tanh %11 : vector<2x128xf32>
    %13 = vector.extract_strided_slice %12 {offsets = [0, 0], sizes = [2, 32], strides = [1, 1]} : vector<2x128xf32> to vector<2x32xf32>
    %cst_8 = arith.constant 1.000000e+00 : f32
    %14 = vector.broadcast %cst_8 : f32 to vector<2x32xf32>
    %15 = arith.addf %13, %14 : vector<2x32xf32>
    %cst_9 = arith.constant 5.000000e-01 : f32
    %16 = vector.broadcast %cst_9 : f32 to vector<2x32xf32>
    %17 = arith.mulf %16, %15 : vector<2x32xf32>
    %18 = vector.extract_strided_slice %12 {offsets = [0, 32], sizes = [2, 32], strides = [1, 1]} : vector<2x128xf32> to vector<2x32xf32>
    %cst_10 = arith.constant 1.000000e+00 : f32
    %19 = vector.broadcast %cst_10 : f32 to vector<2x32xf32>
    %20 = arith.addf %18, %19 : vector<2x32xf32>
    %cst_11 = arith.constant 5.000000e-01 : f32
    %21 = vector.broadcast %cst_11 : f32 to vector<2x32xf32>
    %22 = arith.mulf %21, %20 : vector<2x32xf32>
    %23 = vector.extract_strided_slice %12 {offsets = [0, 64], sizes = [2, 32], strides = [1, 1]} : vector<2x128xf32> to vector<2x32xf32>
    %24 = vector.extract_strided_slice %12 {offsets = [0, 96], sizes = [2, 32], strides = [1, 1]} : vector<2x128xf32> to vector<2x32xf32>
    %cst_12 = arith.constant 1.000000e+00 : f32
    %25 = vector.broadcast %cst_12 : f32 to vector<2x32xf32>
    %26 = arith.addf %24, %25 : vector<2x32xf32>
    %cst_13 = arith.constant 5.000000e-01 : f32
    %27 = vector.broadcast %cst_13 : f32 to vector<2x32xf32>
    %28 = arith.mulf %27, %26 : vector<2x32xf32>
    %29 = arith.mulf %22, %8 : vector<2x32xf32>
    %30 = arith.mulf %17, %23 : vector<2x32xf32>
    %31 = arith.addf %29, %30 : vector<2x32xf32>
    %32 = math.tanh %31 : vector<2x32xf32>
    %33 = arith.mulf %28, %32 : vector<2x32xf32>
    %34 = vector.extract_strided_slice %5 {offsets = [2, 0], sizes = [2, 128], strides = [1, 1]} : vector<16x128xf32> to vector<2x128xf32>
    %cst_14 = arith.constant dense<0.000000e+00> : vector<2x128xf32>
    %35 = tpu.matmul %33, %6, %cst_14 {dimension_numbers = #tpu.dot_dimension_numbers<[1], [0], [0], [1], [0, 0, 1, 1], [], []>} : vector<2x32xf32>, vector<32x128xf32>, vector<2x128xf32> -> vector<2x128xf32>
    %36 = arith.addf %34, %35 : vector<2x128xf32>
    %37 = math.tanh %36 : vector<2x128xf32>
    %38 = vector.extract_strided_slice %37 {offsets = [0, 0], sizes = [2, 32], strides = [1, 1]} : vector<2x128xf32> to vector<2x32xf32>
    %cst_15 = arith.constant 1.000000e+00 : f32
    %39 = vector.broadcast %cst_15 : f32 to vector<2x32xf32>
    %40 = arith.addf %38, %39 : vector<2x32xf32>
    %cst_16 = arith.constant 5.000000e-01 : f32
    %41 = vector.broadcast %cst_16 : f32 to vector<2x32xf32>
    %42 = arith.mulf %41, %40 : vector<2x32xf32>
    %43 = vector.extract_strided_slice %37 {offsets = [0, 32], sizes = [2, 32], strides = [1, 1]} : vector<2x128xf32> to vector<2x32xf32>
    %cst_17 = arith.constant 1.000000e+00 : f32
    %44 = vector.broadcast %cst_17 : f32 to vector<2x32xf32>
    %45 = arith.addf %43, %44 : vector<2x32xf32>
    %cst_18 = arith.constant 5.000000e-01 : f32
    %46 = vector.broadcast %cst_18 : f32 to vector<2x32xf32>
    %47 = arith.mulf %46, %45 : vector<2x32xf32>
    %48 = vector.extract_strided_slice %37 {offsets = [0, 64], sizes = [2, 32], strides = [1, 1]} : vector<2x128xf32> to vector<2x32xf32>
    %49 = vector.extract_strided_slice %37 {offsets = [0, 96], sizes = [2, 32], strides = [1, 1]} : vector<2x128xf32> to vector<2x32xf32>
    %cst_19 = arith.constant 1.000000e+00 : f32
    %50 = vector.broadcast %cst_19 : f32 to vector<2x32xf32>
    %51 = arith.addf %49, %50 : vector<2x32xf32>
    %cst_20 = arith.constant 5.000000e-01 : f32
    %52 = vector.broadcast %cst_20 : f32 to vector<2x32xf32>
    %53 = arith.mulf %52, %51 : vector<2x32xf32>
    %54 = arith.mulf %47, %31 : vector<2x32xf32>
    %55 = arith.mulf %42, %48 : vector<2x32xf32>
    %56 = arith.addf %54, %55 : vector<2x32xf32>
    %57 = math.tanh %56 : vector<2x32xf32>
    %58 = arith.mulf %53, %57 : vector<2x32xf32>
    %59 = vector.extract_strided_slice %5 {offsets = [4, 0], sizes = [2, 128], strides = [1, 1]} : vector<16x128xf32> to vector<2x128xf32>
    %cst_21 = arith.constant dense<0.000000e+00> : vector<2x128xf32>
    %60 = tpu.matmul %58, %6, %cst_21 {dimension_numbers = #tpu.dot_dimension_numbers<[1], [0], [0], [1], [0, 0, 1, 1], [], []>} : vector<2x32xf32>, vector<32x128xf32>, vector<2x128xf32> -> vector<2x128xf32>
    %61 = arith.addf %59, %60 : vector<2x128xf32>
    %62 = math.tanh %61 : vector<2x128xf32>
    %63 = vector.extract_strided_slice %62 {offsets = [0, 0], sizes = [2, 32], strides = [1, 1]} : vector<2x128xf32> to vector<2x32xf32>
    %cst_22 = arith.constant 1.000000e+00 : f32
    %64 = vector.broadcast %cst_22 : f32 to vector<2x32xf32>
    %65 = arith.addf %63, %64 : vector<2x32xf32>
    %cst_23 = arith.constant 5.000000e-01 : f32
    %66 = vector.broadcast %cst_23 : f32 to vector<2x32xf32>
    %67 = arith.mulf %66, %65 : vector<2x32xf32>
    %68 = vector.extract_strided_slice %62 {offsets = [0, 32], sizes = [2, 32], strides = [1, 1]} : vector<2x128xf32> to vector<2x32xf32>
    %cst_24 = arith.constant 1.000000e+00 : f32
    %69 = vector.broadcast %cst_24 : f32 to vector<2x32xf32>
    %70 = arith.addf %68, %69 : vector<2x32xf32>
    %cst_25 = arith.constant 5.000000e-01 : f32
    %71 = vector.broadcast %cst_25 : f32 to vector<2x32xf32>
    %72 = arith.mulf %71, %70 : vector<2x32xf32>
    %73 = vector.extract_strided_slice %62 {offsets = [0, 64], sizes = [2, 32], strides = [1, 1]} : vector<2x128xf32> to vector<2x32xf32>
    %74 = vector.extract_strided_slice %62 {offsets = [0, 96], sizes = [2, 32], strides = [1, 1]} : vector<2x128xf32> to vector<2x32xf32>
    %cst_26 = arith.constant 1.000000e+00 : f32
    %75 = vector.broadcast %cst_26 : f32 to vector<2x32xf32>
    %76 = arith.addf %74, %75 : vector<2x32xf32>
    %cst_27 = arith.constant 5.000000e-01 : f32
    %77 = vector.broadcast %cst_27 : f32 to vector<2x32xf32>
    %78 = arith.mulf %77, %76 : vector<2x32xf32>
    %79 = arith.mulf %72, %56 : vector<2x32xf32>
    %80 = arith.mulf %67, %73 : vector<2x32xf32>
    %81 = arith.addf %79, %80 : vector<2x32xf32>
    %82 = math.tanh %81 : vector<2x32xf32>
    %83 = arith.mulf %78, %82 : vector<2x32xf32>
    %84 = vector.extract_strided_slice %5 {offsets = [6, 0], sizes = [2, 128], strides = [1, 1]} : vector<16x128xf32> to vector<2x128xf32>
    %cst_28 = arith.constant dense<0.000000e+00> : vector<2x128xf32>
    %85 = tpu.matmul %83, %6, %cst_28 {dimension_numbers = #tpu.dot_dimension_numbers<[1], [0], [0], [1], [0, 0, 1, 1], [], []>} : vector<2x32xf32>, vector<32x128xf32>, vector<2x128xf32> -> vector<2x128xf32>
    %86 = arith.addf %84, %85 : vector<2x128xf32>
    %87 = math.tanh %86 : vector<2x128xf32>
    %88 = vector.extract_strided_slice %87 {offsets = [0, 0], sizes = [2, 32], strides = [1, 1]} : vector<2x128xf32> to vector<2x32xf32>
    %cst_29 = arith.constant 1.000000e+00 : f32
    %89 = vector.broadcast %cst_29 : f32 to vector<2x32xf32>
    %90 = arith.addf %88, %89 : vector<2x32xf32>
    %cst_30 = arith.constant 5.000000e-01 : f32
    %91 = vector.broadcast %cst_30 : f32 to vector<2x32xf32>
    %92 = arith.mulf %91, %90 : vector<2x32xf32>
    %93 = vector.extract_strided_slice %87 {offsets = [0, 32], sizes = [2, 32], strides = [1, 1]} : vector<2x128xf32> to vector<2x32xf32>
    %cst_31 = arith.constant 1.000000e+00 : f32
    %94 = vector.broadcast %cst_31 : f32 to vector<2x32xf32>
    %95 = arith.addf %93, %94 : vector<2x32xf32>
    %cst_32 = arith.constant 5.000000e-01 : f32
    %96 = vector.broadcast %cst_32 : f32 to vector<2x32xf32>
    %97 = arith.mulf %96, %95 : vector<2x32xf32>
    %98 = vector.extract_strided_slice %87 {offsets = [0, 64], sizes = [2, 32], strides = [1, 1]} : vector<2x128xf32> to vector<2x32xf32>
    %99 = vector.extract_strided_slice %87 {offsets = [0, 96], sizes = [2, 32], strides = [1, 1]} : vector<2x128xf32> to vector<2x32xf32>
    %cst_33 = arith.constant 1.000000e+00 : f32
    %100 = vector.broadcast %cst_33 : f32 to vector<2x32xf32>
    %101 = arith.addf %99, %100 : vector<2x32xf32>
    %cst_34 = arith.constant 5.000000e-01 : f32
    %102 = vector.broadcast %cst_34 : f32 to vector<2x32xf32>
    %103 = arith.mulf %102, %101 : vector<2x32xf32>
    %104 = arith.mulf %97, %81 : vector<2x32xf32>
    %105 = arith.mulf %92, %98 : vector<2x32xf32>
    %106 = arith.addf %104, %105 : vector<2x32xf32>
    %107 = math.tanh %106 : vector<2x32xf32>
    %108 = arith.mulf %103, %107 : vector<2x32xf32>
    %109 = vector.extract_strided_slice %5 {offsets = [8, 0], sizes = [2, 128], strides = [1, 1]} : vector<16x128xf32> to vector<2x128xf32>
    %cst_35 = arith.constant dense<0.000000e+00> : vector<2x128xf32>
    %110 = tpu.matmul %108, %6, %cst_35 {dimension_numbers = #tpu.dot_dimension_numbers<[1], [0], [0], [1], [0, 0, 1, 1], [], []>} : vector<2x32xf32>, vector<32x128xf32>, vector<2x128xf32> -> vector<2x128xf32>
    %111 = arith.addf %109, %110 : vector<2x128xf32>
    %112 = math.tanh %111 : vector<2x128xf32>
    %113 = vector.extract_strided_slice %112 {offsets = [0, 0], sizes = [2, 32], strides = [1, 1]} : vector<2x128xf32> to vector<2x32xf32>
    %cst_36 = arith.constant 1.000000e+00 : f32
    %114 = vector.broadcast %cst_36 : f32 to vector<2x32xf32>
    %115 = arith.addf %113, %114 : vector<2x32xf32>
    %cst_37 = arith.constant 5.000000e-01 : f32
    %116 = vector.broadcast %cst_37 : f32 to vector<2x32xf32>
    %117 = arith.mulf %116, %115 : vector<2x32xf32>
    %118 = vector.extract_strided_slice %112 {offsets = [0, 32], sizes = [2, 32], strides = [1, 1]} : vector<2x128xf32> to vector<2x32xf32>
    %cst_38 = arith.constant 1.000000e+00 : f32
    %119 = vector.broadcast %cst_38 : f32 to vector<2x32xf32>
    %120 = arith.addf %118, %119 : vector<2x32xf32>
    %cst_39 = arith.constant 5.000000e-01 : f32
    %121 = vector.broadcast %cst_39 : f32 to vector<2x32xf32>
    %122 = arith.mulf %121, %120 : vector<2x32xf32>
    %123 = vector.extract_strided_slice %112 {offsets = [0, 64], sizes = [2, 32], strides = [1, 1]} : vector<2x128xf32> to vector<2x32xf32>
    %124 = vector.extract_strided_slice %112 {offsets = [0, 96], sizes = [2, 32], strides = [1, 1]} : vector<2x128xf32> to vector<2x32xf32>
    %cst_40 = arith.constant 1.000000e+00 : f32
    %125 = vector.broadcast %cst_40 : f32 to vector<2x32xf32>
    %126 = arith.addf %124, %125 : vector<2x32xf32>
    %cst_41 = arith.constant 5.000000e-01 : f32
    %127 = vector.broadcast %cst_41 : f32 to vector<2x32xf32>
    %128 = arith.mulf %127, %126 : vector<2x32xf32>
    %129 = arith.mulf %122, %106 : vector<2x32xf32>
    %130 = arith.mulf %117, %123 : vector<2x32xf32>
    %131 = arith.addf %129, %130 : vector<2x32xf32>
    %132 = math.tanh %131 : vector<2x32xf32>
    %133 = arith.mulf %128, %132 : vector<2x32xf32>
    %134 = vector.extract_strided_slice %5 {offsets = [10, 0], sizes = [2, 128], strides = [1, 1]} : vector<16x128xf32> to vector<2x128xf32>
    %cst_42 = arith.constant dense<0.000000e+00> : vector<2x128xf32>
    %135 = tpu.matmul %133, %6, %cst_42 {dimension_numbers = #tpu.dot_dimension_numbers<[1], [0], [0], [1], [0, 0, 1, 1], [], []>} : vector<2x32xf32>, vector<32x128xf32>, vector<2x128xf32> -> vector<2x128xf32>
    %136 = arith.addf %134, %135 : vector<2x128xf32>
    %137 = math.tanh %136 : vector<2x128xf32>
    %138 = vector.extract_strided_slice %137 {offsets = [0, 0], sizes = [2, 32], strides = [1, 1]} : vector<2x128xf32> to vector<2x32xf32>
    %cst_43 = arith.constant 1.000000e+00 : f32
    %139 = vector.broadcast %cst_43 : f32 to vector<2x32xf32>
    %140 = arith.addf %138, %139 : vector<2x32xf32>
    %cst_44 = arith.constant 5.000000e-01 : f32
    %141 = vector.broadcast %cst_44 : f32 to vector<2x32xf32>
    %142 = arith.mulf %141, %140 : vector<2x32xf32>
    %143 = vector.extract_strided_slice %137 {offsets = [0, 32], sizes = [2, 32], strides = [1, 1]} : vector<2x128xf32> to vector<2x32xf32>
    %cst_45 = arith.constant 1.000000e+00 : f32
    %144 = vector.broadcast %cst_45 : f32 to vector<2x32xf32>
    %145 = arith.addf %143, %144 : vector<2x32xf32>
    %cst_46 = arith.constant 5.000000e-01 : f32
    %146 = vector.broadcast %cst_46 : f32 to vector<2x32xf32>
    %147 = arith.mulf %146, %145 : vector<2x32xf32>
    %148 = vector.extract_strided_slice %137 {offsets = [0, 64], sizes = [2, 32], strides = [1, 1]} : vector<2x128xf32> to vector<2x32xf32>
    %149 = vector.extract_strided_slice %137 {offsets = [0, 96], sizes = [2, 32], strides = [1, 1]} : vector<2x128xf32> to vector<2x32xf32>
    %cst_47 = arith.constant 1.000000e+00 : f32
    %150 = vector.broadcast %cst_47 : f32 to vector<2x32xf32>
    %151 = arith.addf %149, %150 : vector<2x32xf32>
    %cst_48 = arith.constant 5.000000e-01 : f32
    %152 = vector.broadcast %cst_48 : f32 to vector<2x32xf32>
    %153 = arith.mulf %152, %151 : vector<2x32xf32>
    %154 = arith.mulf %147, %131 : vector<2x32xf32>
    %155 = arith.mulf %142, %148 : vector<2x32xf32>
    %156 = arith.addf %154, %155 : vector<2x32xf32>
    %157 = math.tanh %156 : vector<2x32xf32>
    %158 = arith.mulf %153, %157 : vector<2x32xf32>
    %159 = vector.extract_strided_slice %5 {offsets = [12, 0], sizes = [2, 128], strides = [1, 1]} : vector<16x128xf32> to vector<2x128xf32>
    %cst_49 = arith.constant dense<0.000000e+00> : vector<2x128xf32>
    %160 = tpu.matmul %158, %6, %cst_49 {dimension_numbers = #tpu.dot_dimension_numbers<[1], [0], [0], [1], [0, 0, 1, 1], [], []>} : vector<2x32xf32>, vector<32x128xf32>, vector<2x128xf32> -> vector<2x128xf32>
    %161 = arith.addf %159, %160 : vector<2x128xf32>
    %162 = math.tanh %161 : vector<2x128xf32>
    %163 = vector.extract_strided_slice %162 {offsets = [0, 0], sizes = [2, 32], strides = [1, 1]} : vector<2x128xf32> to vector<2x32xf32>
    %cst_50 = arith.constant 1.000000e+00 : f32
    %164 = vector.broadcast %cst_50 : f32 to vector<2x32xf32>
    %165 = arith.addf %163, %164 : vector<2x32xf32>
    %cst_51 = arith.constant 5.000000e-01 : f32
    %166 = vector.broadcast %cst_51 : f32 to vector<2x32xf32>
    %167 = arith.mulf %166, %165 : vector<2x32xf32>
    %168 = vector.extract_strided_slice %162 {offsets = [0, 32], sizes = [2, 32], strides = [1, 1]} : vector<2x128xf32> to vector<2x32xf32>
    %cst_52 = arith.constant 1.000000e+00 : f32
    %169 = vector.broadcast %cst_52 : f32 to vector<2x32xf32>
    %170 = arith.addf %168, %169 : vector<2x32xf32>
    %cst_53 = arith.constant 5.000000e-01 : f32
    %171 = vector.broadcast %cst_53 : f32 to vector<2x32xf32>
    %172 = arith.mulf %171, %170 : vector<2x32xf32>
    %173 = vector.extract_strided_slice %162 {offsets = [0, 64], sizes = [2, 32], strides = [1, 1]} : vector<2x128xf32> to vector<2x32xf32>
    %174 = vector.extract_strided_slice %162 {offsets = [0, 96], sizes = [2, 32], strides = [1, 1]} : vector<2x128xf32> to vector<2x32xf32>
    %cst_54 = arith.constant 1.000000e+00 : f32
    %175 = vector.broadcast %cst_54 : f32 to vector<2x32xf32>
    %176 = arith.addf %174, %175 : vector<2x32xf32>
    %cst_55 = arith.constant 5.000000e-01 : f32
    %177 = vector.broadcast %cst_55 : f32 to vector<2x32xf32>
    %178 = arith.mulf %177, %176 : vector<2x32xf32>
    %179 = arith.mulf %172, %156 : vector<2x32xf32>
    %180 = arith.mulf %167, %173 : vector<2x32xf32>
    %181 = arith.addf %179, %180 : vector<2x32xf32>
    %182 = math.tanh %181 : vector<2x32xf32>
    %183 = arith.mulf %178, %182 : vector<2x32xf32>
    %184 = vector.extract_strided_slice %5 {offsets = [14, 0], sizes = [2, 128], strides = [1, 1]} : vector<16x128xf32> to vector<2x128xf32>
    %cst_56 = arith.constant dense<0.000000e+00> : vector<2x128xf32>
    %185 = tpu.matmul %183, %6, %cst_56 {dimension_numbers = #tpu.dot_dimension_numbers<[1], [0], [0], [1], [0, 0, 1, 1], [], []>} : vector<2x32xf32>, vector<32x128xf32>, vector<2x128xf32> -> vector<2x128xf32>
    %186 = arith.addf %184, %185 : vector<2x128xf32>
    %187 = math.tanh %186 : vector<2x128xf32>
    %188 = vector.extract_strided_slice %187 {offsets = [0, 0], sizes = [2, 32], strides = [1, 1]} : vector<2x128xf32> to vector<2x32xf32>
    %cst_57 = arith.constant 1.000000e+00 : f32
    %189 = vector.broadcast %cst_57 : f32 to vector<2x32xf32>
    %190 = arith.addf %188, %189 : vector<2x32xf32>
    %cst_58 = arith.constant 5.000000e-01 : f32
    %191 = vector.broadcast %cst_58 : f32 to vector<2x32xf32>
    %192 = arith.mulf %191, %190 : vector<2x32xf32>
    %193 = vector.extract_strided_slice %187 {offsets = [0, 32], sizes = [2, 32], strides = [1, 1]} : vector<2x128xf32> to vector<2x32xf32>
    %cst_59 = arith.constant 1.000000e+00 : f32
    %194 = vector.broadcast %cst_59 : f32 to vector<2x32xf32>
    %195 = arith.addf %193, %194 : vector<2x32xf32>
    %cst_60 = arith.constant 5.000000e-01 : f32
    %196 = vector.broadcast %cst_60 : f32 to vector<2x32xf32>
    %197 = arith.mulf %196, %195 : vector<2x32xf32>
    %198 = vector.extract_strided_slice %187 {offsets = [0, 64], sizes = [2, 32], strides = [1, 1]} : vector<2x128xf32> to vector<2x32xf32>
    %199 = vector.extract_strided_slice %187 {offsets = [0, 96], sizes = [2, 32], strides = [1, 1]} : vector<2x128xf32> to vector<2x32xf32>
    %cst_61 = arith.constant 1.000000e+00 : f32
    %200 = vector.broadcast %cst_61 : f32 to vector<2x32xf32>
    %201 = arith.addf %199, %200 : vector<2x32xf32>
    %cst_62 = arith.constant 5.000000e-01 : f32
    %202 = vector.broadcast %cst_62 : f32 to vector<2x32xf32>
    %203 = arith.mulf %202, %201 : vector<2x32xf32>
    %204 = arith.mulf %197, %181 : vector<2x32xf32>
    %205 = arith.mulf %192, %198 : vector<2x32xf32>
    %206 = arith.addf %204, %205 : vector<2x32xf32>
    %207 = math.tanh %206 : vector<2x32xf32>
    %208 = arith.mulf %203, %207 : vector<2x32xf32>
    %c48 = arith.constant 48 : index
    %c0_63 = arith.constant 0 : index
    %209 = vector.load %arg1[%c48, %c0_63] : memref<360x128xf32, #tpu.memory_space<vmem>>, vector<32x128xf32>
    %cst_64 = arith.constant dense<0.000000e+00> : vector<2x128xf32>
    %210 = tpu.matmul %208, %209, %cst_64 {dimension_numbers = #tpu.dot_dimension_numbers<[1], [0], [0], [1], [0, 0, 1, 1], [], []>} : vector<2x32xf32>, vector<32x128xf32>, vector<2x128xf32> -> vector<2x128xf32>
    %c80 = arith.constant 80 : index
    %c0_65 = arith.constant 0 : index
    %211 = vector.load %arg1[%c80, %c0_65] : memref<360x128xf32, #tpu.memory_space<vmem>>, vector<1x128xf32>
    %212 = vector.broadcast %211 : vector<1x128xf32> to vector<2x128xf32>
    %213 = arith.addf %210, %212 : vector<2x128xf32>
    %cst_66 = arith.constant 0.000000e+00 : f32
    %214 = vector.broadcast %cst_66 : f32 to vector<2x128xf32>
    %215 = arith.maximumf %213, %214 : vector<2x128xf32>
    %c88 = arith.constant 88 : index
    %c0_67 = arith.constant 0 : index
    %216 = vector.load %arg1[%c88, %c0_67] : memref<360x128xf32, #tpu.memory_space<vmem>>, vector<128x128xf32>
    %cst_68 = arith.constant dense<0.000000e+00> : vector<2x128xf32>
    %217 = tpu.matmul %215, %216, %cst_68 {dimension_numbers = #tpu.dot_dimension_numbers<[1], [0], [0], [1], [0, 0, 1, 1], [], []>} : vector<2x128xf32>, vector<128x128xf32>, vector<2x128xf32> -> vector<2x128xf32>
    %c216 = arith.constant 216 : index
    %c0_69 = arith.constant 0 : index
    %218 = vector.load %arg1[%c216, %c0_69] : memref<360x128xf32, #tpu.memory_space<vmem>>, vector<1x128xf32>
    %219 = vector.broadcast %218 : vector<1x128xf32> to vector<2x128xf32>
    %220 = arith.addf %217, %219 : vector<2x128xf32>
    %cst_70 = arith.constant 0.000000e+00 : f32
    %221 = vector.broadcast %cst_70 : f32 to vector<2x128xf32>
    %222 = arith.maximumf %220, %221 : vector<2x128xf32>
    %c224 = arith.constant 224 : index
    %c0_71 = arith.constant 0 : index
    %223 = vector.load %arg1[%c224, %c0_71] : memref<360x128xf32, #tpu.memory_space<vmem>>, vector<128x128xf32>
    %cst_72 = arith.constant dense<0.000000e+00> : vector<2x128xf32>
    %224 = tpu.matmul %222, %223, %cst_72 {dimension_numbers = #tpu.dot_dimension_numbers<[1], [0], [0], [1], [0, 0, 1, 1], [], []>} : vector<2x128xf32>, vector<128x128xf32>, vector<2x128xf32> -> vector<2x128xf32>
    %c352 = arith.constant 352 : index
    %c0_73 = arith.constant 0 : index
    %225 = vector.load %arg1[%c352, %c0_73] : memref<360x128xf32, #tpu.memory_space<vmem>>, vector<1x128xf32>
    %226 = vector.broadcast %225 : vector<1x128xf32> to vector<2x128xf32>
    %227 = arith.addf %224, %226 : vector<2x128xf32>
    %c0_74 = arith.constant 0 : index
    %c0_75 = arith.constant 0 : index
    %228 = vector.load %arg2[%c0_74, %c0_75] : memref<2x128xf32, #tpu.memory_space<vmem>>, vector<2x128xf32>
    tpu.vector_store %arg2[%c0_74, %c0_75], %227 {strides = array<i32>} : memref<2x128xf32, #tpu.memory_space<vmem>>, vector<2x128xf32>,
    return
  }
}

</mosaic_0001>

<llo_original>
// kernel: lstm_model_forward.1
$region0: #{lstm_model_forward.1}
  #allocation0 [shape = 'u32[]', space=smem, size = 0x4, offset = 0x4, fixed_abs, tag = 'smem constant byte address 0x4 - core index']
  #allocation1 [shape = 'u32[72,128]{1,0:T(1,128)}', space=vmem, size = 0x9000, scoped, tag = 'internal scratch']
  %s0 = inlined_call_operand.vmem [shape: f32[16,4], index: 0, kind: input, shape index: {}]
  %s1 = inlined_call_operand.hbm [shape: f32[360,128], index: 1, kind: input, shape index: {}]
  %s2 = inlined_call_operand.vmem [shape: f32[2,128], index: 2, kind: output, shape index: {}]
  %s3 = sld [smem:[#allocation0]]
  $region22: #{lstm_model_forward.1} parent=0
    _
  %s5 = ssub.s32 1, %s3
  %s6 = scalar_select 0, %s5, %s3
  $region1: #{lstm_model_forward.1} parent=0
    #allocation2 [shape = 'u8[184320]{0}', space=vmem, size = 0x2d000, scoped, tag = 'input window, operand 1, single buffered']
    #allocation3 [shape = 's32[1]{0}', space=sflag, size = 0x4, scoped, tag = 'scoped memory for lstm_model_forward.1']
    %7 = vsyncpa [#allocation3], 0
    // Predicated region
    $region2: #{lstm_model_forward.1} parent=1 // pred_check
      _
    $region3: #{lstm_model_forward.1} parent=1 // pred_check_branch
      %9 = sbr.rel (0) target = $region5
    $region4: #{lstm_model_forward.1} parent=1 // pred_region
      _
    $region5: #{lstm_model_forward.1} parent=1 // pred_fallthru
      _
    // Predicated region
    $region6: #{lstm_model_forward.1} parent=1 // pred_check
      _
    $region7: #{lstm_model_forward.1} parent=1 // pred_check_branch
      %11 = sbr.rel (0) target = $region9
    $region8: #{lstm_model_forward.1} parent=1 // pred_region
      %13 = vsyncadd [#allocation3], 0
      %s14 = sshll.u32 %s1, 4
      %s15 = int_to_ptr.hbm [resolvable:$true] %s14
      %s16 = sshll.u32 [#allocation2], 4
      %s17 = int_to_ptr.vmem [resolvable:$true] %s16
      %22 = dma.hbm_to_vmem [thread:$0]  %s15, 5760, %s17, [#allocation3], 128, 128, 8
    $region9: #{lstm_model_forward.1} parent=1 // pred_fallthru
      _
    // Predicated region
    $region10: #{lstm_model_forward.1} parent=1 // pred_check
      _
    $region11: #{lstm_model_forward.1} parent=1 // pred_check_branch
      %24 = sbr.rel (0) target = $region13
    $region12: #{lstm_model_forward.1} parent=1 // pred_region
      %26 = dma.done [#allocation3], 5760
    $region13: #{lstm_model_forward.1} parent=1 // pred_fallthru
      _
    %v27 = vld [vmem:[%s0] sm:$0xff]
    %v28 = vld [vmem:[%s0 + $0x8] sm:$0xff]
    %v29 = vld [vmem:[#allocation2] sm:$0xf]
    %v30 = vld [vmem:[#allocation2 + $0x28] sm:$0x1]
    %v31 = vperm.slane %v30, 0
    %vm32 = vcmask 31744
    %v34 = vsel %vm32, %v27, 0
    %v37 = vsel %vm32, %v28, 0
    %vm39 = vcmask 1043456
    %v41 = vsel %vm39, %v29, 0
    %43 = vmatpush.msra.mxu0 0.0
    %44 = vmatpush.msra.mxu0 0.0
    %45 = vmatpush.msra.mxu0 0.0
    %46 = vmatpush.msra.mxu0 0.0
    %47 = vmatpush.msra.mxu0 0.0
    %48 = vmatpush.msra.mxu0 0.0
    %49 = vmatpush.msra.mxu0 0.0
    %50 = vmatpush.msra.mxu0 0.0
    %51 = vmatpush.msra.mxu0 0.0
    %52 = vmatpush.msra.mxu0 0.0
    %53 = vmatpush.msra.mxu0 0.0
    %54 = vmatpush.msra.mxu0 0.0
    %55 = vmatpush.msra.mxu0 0.0
    %56 = vmatpush.msra.mxu0 0.0
    %57 = vmatpush.msra.mxu0 0.0
    %58 = vmatpush.msra.mxu0 %v41
    %59 = vmatmul.f32.gmra.mxu0 %v34
    %v60 = vpop.f32.mrf.mxu0
    %v61 = vadd.f32 %v31, %v60
    %62 = vmatmul.f32.gmra.mxu0 %v37
    %v63 = vpop.f32.mrf.mxu0
    %v64 = vadd.f32 %v31, %v63
    %65 = vdwg.mxu0
    %v66 = vld [vmem:[#allocation2 + $0x8] sm:$0xff]
    %v67 = vld [vmem:[#allocation2 + $0x10] sm:$0xff]
    %v68 = vld [vmem:[#allocation2 + $0x18] sm:$0xff]
    %v69 = vld [vmem:[#allocation2 + $0x20] sm:$0xff]
    %vm70 = vcmask 261120
    %v72 = vsel %vm70, 0.0, 0
    %74 = vmatpush.msra.mxu0 0.0
    %75 = vmatpush.msra.mxu0 0.0
    %76 = vmatpush.msra.mxu0 0.0
    %77 = vmatpush.msra.mxu0 0.0
    %78 = vmatpush.msra.mxu0 0.0
    %79 = vmatpush.msra.mxu0 0.0
    %80 = vmatpush.msra.mxu0 0.0
    %81 = vmatpush.msra.mxu0 0.0
    %82 = vmatpush.msra.mxu0 0.0
    %83 = vmatpush.msra.mxu0 0.0
    %84 = vmatpush.msra.mxu0 0.0
    %85 = vmatpush.msra.mxu0 0.0
    %86 = vmatpush.msra.mxu0 %v69
    %87 = vmatpush.msra.mxu0 %v68
    %88 = vmatpush.msra.mxu0 %v67
    %89 = vmatpush.msra.mxu0 %v66
    %90 = vmatmul.f32.gmra.mxu0 %v72
    %v91 = vpop.f32.mrf.mxu0
    %v92 = vadd.f32 0.0, %v91
    %93 = vdwg.mxu0
    %v94 = vadd.f32 %v61, %v92
    %v95 = vtanh.pop %v94
    %v96 = vadd.f32 %v95, 1.0
    %v97 = vmul.f32 %v96, 0.5
    %v98 = vmul.f32 %v97, 0.0
    %100 = vrot.lane.b32.xlu0 %v95, 64
    %v101 = vpop.permute.xlu0 %100
    %v103 = vmul.f32 %v97, %v101
    %105 = vrot.lane.b32.xlu0 %v103, 32
    %v106 = vpop.permute.xlu0 %105
    %v108 = vadd.f32 %v98, %v106
    %v109 = vtanh.pop %v108
    %111 = vrot.lane.b32.xlu0 %v109, 64
    %v112 = vpop.permute.xlu0 %111
    %v114 = vmul.f32 %v97, %v112
    %116 = vrot.lane.b32.xlu0 %v114, 32
    %v117 = vpop.permute.xlu0 %116
    %v118 = vsel %vm70, %v117, 0
    %120 = vmatpush.msra.mxu0 0.0
    %121 = vmatpush.msra.mxu0 0.0
    %122 = vmatpush.msra.mxu0 0.0
    %123 = vmatpush.msra.mxu0 0.0
    %124 = vmatpush.msra.mxu0 0.0
    %125 = vmatpush.msra.mxu0 0.0
    %126 = vmatpush.msra.mxu0 0.0
    %127 = vmatpush.msra.mxu0 0.0
    %128 = vmatpush.msra.mxu0 0.0
    %129 = vmatpush.msra.mxu0 0.0
    %130 = vmatpush.msra.mxu0 0.0
    %131 = vmatpush.msra.mxu0 0.0
    %132 = vmatpush.msra.mxu0 %v69
    %133 = vmatpush.msra.mxu0 %v68
    %134 = vmatpush.msra.mxu0 %v67
    %135 = vmatpush.msra.mxu0 %v66
    %136 = vmatmul.f32.gmra.mxu0 %v118
    %v137 = vpop.f32.mrf.mxu0
    %v138 = vadd.f32 0.0, %v137
    %139 = vdwg.mxu0
    %v141 = vrot.slane %v138, 6
    %v143 = vadd.f32 %v61, %v141
    %v144 = vtanh.pop %v143
    %v145 = vadd.f32 %v144, 1.0
    %v146 = vmul.f32 %v145, 0.5
    %v148 = vrot.slane %v108, 6
    %v150 = vmul.f32 %v146, %v148
    %152 = vrot.lane.b32.xlu0 %v144, 64
    %v153 = vpop.permute.xlu0 %152
    %v155 = vmul.f32 %v146, %v153
    %157 = vrot.lane.b32.xlu0 %v155, 32
    %v158 = vpop.permute.xlu0 %157
    %v160 = vadd.f32 %v150, %v158
    %v161 = vtanh.pop %v160
    %163 = vrot.lane.b32.xlu0 %v161, 64
    %v164 = vpop.permute.xlu0 %163
    %v166 = vmul.f32 %v146, %v164
    %v168 = vrot.slane %v166, 2
    %169 = vrot.lane.b32.xlu0 %v168, 32
    %v170 = vpop.permute.xlu0 %169
    %v171 = vsel %vm70, %v170, 0
    %173 = vmatpush.msra.mxu0 0.0
    %174 = vmatpush.msra.mxu0 0.0
    %175 = vmatpush.msra.mxu0 0.0
    %176 = vmatpush.msra.mxu0 0.0
    %177 = vmatpush.msra.mxu0 0.0
    %178 = vmatpush.msra.mxu0 0.0
    %179 = vmatpush.msra.mxu0 0.0
    %180 = vmatpush.msra.mxu0 0.0
    %181 = vmatpush.msra.mxu0 0.0
    %182 = vmatpush.msra.mxu0 0.0
    %183 = vmatpush.msra.mxu0 0.0
    %184 = vmatpush.msra.mxu0 0.0
    %185 = vmatpush.msra.mxu0 %v69
    %186 = vmatpush.msra.mxu0 %v68
    %187 = vmatpush.msra.mxu0 %v67
    %188 = vmatpush.msra.mxu0 %v66
    %189 = vmatmul.f32.gmra.mxu0 %v171
    %v190 = vpop.f32.mrf.mxu0
    %v191 = vadd.f32 0.0, %v190
    %192 = vdwg.mxu0
    %v194 = vrot.slane %v191, 4
    %v196 = vadd.f32 %v61, %v194
    %v197 = vtanh.pop %v196
    %v198 = vadd.f32 %v197, 1.0
    %v199 = vmul.f32 %v198, 0.5
    %v201 = vrot.slane %v160, 6
    %v203 = vmul.f32 %v199, %v201
    %205 = vrot.lane.b32.xlu0 %v197, 64
    %v206 = vpop.permute.xlu0 %205
    %v208 = vmul.f32 %v199, %v206
    %210 = vrot.lane.b32.xlu0 %v208, 32
    %v211 = vpop.permute.xlu0 %210
    %v213 = vadd.f32 %v203, %v211
    %v214 = vtanh.pop %v213
    %216 = vrot.lane.b32.xlu0 %v214, 64
    %v217 = vpop.permute.xlu0 %216
    %v219 = vmul.f32 %v199, %v217
    %v221 = vrot.slane %v219, 4
    %222 = vrot.lane.b32.xlu0 %v221, 32
    %v223 = vpop.permute.xlu0 %222
    %v224 = vsel %vm70, %v223, 0
    %226 = vmatpush.msra.mxu0 0.0
    %227 = vmatpush.msra.mxu0 0.0
    %228 = vmatpush.msra.mxu0 0.0
    %229 = vmatpush.msra.mxu0 0.0
    %230 = vmatpush.msra.mxu0 0.0
    %231 = vmatpush.msra.mxu0 0.0
    %232 = vmatpush.msra.mxu0 0.0
    %233 = vmatpush.msra.mxu0 0.0
    %234 = vmatpush.msra.mxu0 0.0
    %235 = vmatpush.msra.mxu0 0.0
    %236 = vmatpush.msra.mxu0 0.0
    %237 = vmatpush.msra.mxu0 0.0
    %238 = vmatpush.msra.mxu0 %v69
    %239 = vmatpush.msra.mxu0 %v68
    %240 = vmatpush.msra.mxu0 %v67
    %241 = vmatpush.msra.mxu0 %v66
    %242 = vmatmul.f32.gmra.mxu0 %v224
    %v243 = vpop.f32.mrf.mxu0
    %v244 = vadd.f32 0.0, %v243
    %245 = vdwg.mxu0
    %v247 = vrot.slane %v244, 2
    %v249 = vadd.f32 %v61, %v247
    %v250 = vtanh.pop %v249
    %v251 = vadd.f32 %v250, 1.0
    %v252 = vmul.f32 %v251, 0.5
    %v254 = vrot.slane %v213, 6
    %v256 = vmul.f32 %v252, %v254
    %258 = vrot.lane.b32.xlu0 %v250, 64
    %v259 = vpop.permute.xlu0 %258
    %v261 = vmul.f32 %v252, %v259
    %263 = vrot.lane.b32.xlu0 %v261, 32
    %v264 = vpop.permute.xlu0 %263
    %v266 = vadd.f32 %v256, %v264
    %v267 = vtanh.pop %v266
    %269 = vrot.lane.b32.xlu0 %v267, 64
    %v270 = vpop.permute.xlu0 %269
    %v272 = vmul.f32 %v252, %v270
    %v274 = vrot.slane %v272, 6
    %275 = vrot.lane.b32.xlu0 %v274, 32
    %v276 = vpop.permute.xlu0 %275
    %v277 = vsel %vm70, %v276, 0
    %279 = vmatpush.msra.mxu0 0.0
    %280 = vmatpush.msra.mxu0 0.0
    %281 = vmatpush.msra.mxu0 0.0
    %282 = vmatpush.msra.mxu0 0.0
    %283 = vmatpush.msra.mxu0 0.0
    %284 = vmatpush.msra.mxu0 0.0
    %285 = vmatpush.msra.mxu0 0.0
    %286 = vmatpush.msra.mxu0 0.0
    %287 = vmatpush.msra.mxu0 0.0
    %288 = vmatpush.msra.mxu0 0.0
    %289 = vmatpush.msra.mxu0 0.0
    %290 = vmatpush.msra.mxu0 0.0
    %291 = vmatpush.msra.mxu0 %v69
    %292 = vmatpush.msra.mxu0 %v68
    %293 = vmatpush.msra.mxu0 %v67
    %294 = vmatpush.msra.mxu0 %v66
    %295 = vmatmul.f32.gmra.mxu0 %v277
    %v296 = vpop.f32.mrf.mxu0
    %v297 = vadd.f32 0.0, %v296
    %298 = vdwg.mxu0
    %v299 = vadd.f32 %v64, %v297
    %v300 = vtanh.pop %v299
    %v301 = vadd.f32 %v300, 1.0
    %v302 = vmul.f32 %v301, 0.5
    %v304 = vrot.slane %v266, 6
    %v306 = vmul.f32 %v302, %v304
    %308 = vrot.lane.b32.xlu0 %v300, 64
    %v309 = vpop.permute.xlu0 %308
    %v311 = vmul.f32 %v302, %v309
    %313 = vrot.lane.b32.xlu0 %v311, 32
    %v314 = vpop.permute.xlu0 %313
    %v316 = vadd.f32 %v306, %v314
    %v317 = vtanh.pop %v316
    %319 = vrot.lane.b32.xlu0 %v317, 64
    %v320 = vpop.permute.xlu0 %319
    %v322 = vmul.f32 %v302, %v320
    %324 = vrot.lane.b32.xlu0 %v322, 32
    %v325 = vpop.permute.xlu0 %324
    %v326 = vsel %vm70, %v325, 0
    %328 = vmatpush.msra.mxu0 0.0
    %329 = vmatpush.msra.mxu0 0.0
    %330 = vmatpush.msra.mxu0 0.0
    %331 = vmatpush.msra.mxu0 0.0
    %332 = vmatpush.msra.mxu0 0.0
    %333 = vmatpush.msra.mxu0 0.0
    %334 = vmatpush.msra.mxu0 0.0
    %335 = vmatpush.msra.mxu0 0.0
    %336 = vmatpush.msra.mxu0 0.0
    %337 = vmatpush.msra.mxu0 0.0
    %338 = vmatpush.msra.mxu0 0.0
    %339 = vmatpush.msra.mxu0 0.0
    %340 = vmatpush.msra.mxu0 %v69
    %341 = vmatpush.msra.mxu0 %v68
    %342 = vmatpush.msra.mxu0 %v67
    %343 = vmatpush.msra.mxu0 %v66
    %344 = vmatmul.f32.gmra.mxu0 %v326
    %v345 = vpop.f32.mrf.mxu0
    %v346 = vadd.f32 0.0, %v345
    %347 = vdwg.mxu0
    %v349 = vrot.slane %v346, 6
    %v351 = vadd.f32 %v64, %v349
    %v352 = vtanh.pop %v351
    %v353 = vadd.f32 %v352, 1.0
    %v354 = vmul.f32 %v353, 0.5
    %v356 = vrot.slane %v316, 6
    %v358 = vmul.f32 %v354, %v356
    %360 = vrot.lane.b32.xlu0 %v352, 64
    %v361 = vpop.permute.xlu0 %360
    %v363 = vmul.f32 %v354, %v361
    %365 = vrot.lane.b32.xlu0 %v363, 32
    %v366 = vpop.permute.xlu0 %365
    %v368 = vadd.f32 %v358, %v366
    %v369 = vtanh.pop %v368
    %371 = vrot.lane.b32.xlu0 %v369, 64
    %v372 = vpop.permute.xlu0 %371
    %v374 = vmul.f32 %v354, %v372
    %v376 = vrot.slane %v374, 2
    %377 = vrot.lane.b32.xlu0 %v376, 32
    %v378 = vpop.permute.xlu0 %377
    %v379 = vsel %vm70, %v378, 0
    %381 = vmatpush.msra.mxu0 0.0
    %382 = vmatpush.msra.mxu0 0.0
    %383 = vmatpush.msra.mxu0 0.0
    %384 = vmatpush.msra.mxu0 0.0
    %385 = vmatpush.msra.mxu0 0.0
    %386 = vmatpush.msra.mxu0 0.0
    %387 = vmatpush.msra.mxu0 0.0
    %388 = vmatpush.msra.mxu0 0.0
    %389 = vmatpush.msra.mxu0 0.0
    %390 = vmatpush.msra.mxu0 0.0
    %391 = vmatpush.msra.mxu0 0.0
    %392 = vmatpush.msra.mxu0 0.0
    %393 = vmatpush.msra.mxu0 %v69
    %394 = vmatpush.msra.mxu0 %v68
    %395 = vmatpush.msra.mxu0 %v67
    %396 = vmatpush.msra.mxu0 %v66
    %397 = vmatmul.f32.gmra.mxu0 %v379
    %v398 = vpop.f32.mrf.mxu0
    %v399 = vadd.f32 0.0, %v398
    %400 = vdwg.mxu0
    %v402 = vrot.slane %v399, 4
    %v404 = vadd.f32 %v64, %v402
    %v405 = vtanh.pop %v404
    %v406 = vadd.f32 %v405, 1.0
    %v407 = vmul.f32 %v406, 0.5
    %v409 = vrot.slane %v368, 6
    %v411 = vmul.f32 %v407, %v409
    %413 = vrot.lane.b32.xlu0 %v405, 64
    %v414 = vpop.permute.xlu0 %413
    %v416 = vmul.f32 %v407, %v414
    %418 = vrot.lane.b32.xlu0 %v416, 32
    %v419 = vpop.permute.xlu0 %418
    %v421 = vadd.f32 %v411, %v419
    %v422 = vtanh.pop %v421
    %424 = vrot.lane.b32.xlu0 %v422, 64
    %v425 = vpop.permute.xlu0 %424
    %v427 = vmul.f32 %v407, %v425
    %v429 = vrot.slane %v427, 4
    %430 = vrot.lane.b32.xlu0 %v429, 32
    %v431 = vpop.permute.xlu0 %430
    %v432 = vsel %vm70, %v431, 0
    %434 = vmatpush.msra.mxu0 0.0
    %435 = vmatpush.msra.mxu0 0.0
    %436 = vmatpush.msra.mxu0 0.0
    %437 = vmatpush.msra.mxu0 0.0
    %438 = vmatpush.msra.mxu0 0.0
    %439 = vmatpush.msra.mxu0 0.0
    %440 = vmatpush.msra.mxu0 0.0
    %441 = vmatpush.msra.mxu0 0.0
    %442 = vmatpush.msra.mxu0 0.0
    %443 = vmatpush.msra.mxu0 0.0
    %444 = vmatpush.msra.mxu0 0.0
    %445 = vmatpush.msra.mxu0 0.0
    %446 = vmatpush.msra.mxu0 %v69
    %447 = vmatpush.msra.mxu0 %v68
    %448 = vmatpush.msra.mxu0 %v67
    %449 = vmatpush.msra.mxu0 %v66
    %450 = vmatmul.f32.gmra.mxu0 %v432
    %v451 = vpop.f32.mrf.mxu0
    %v452 = vadd.f32 0.0, %v451
    %453 = vdwg.mxu0
    %v455 = vrot.slane %v452, 2
    %v457 = vadd.f32 %v64, %v455
    %v458 = vtanh.pop %v457
    %v459 = vadd.f32 %v458, 1.0
    %v460 = vmul.f32 %v459, 0.5
    %v462 = vrot.slane %v421, 6
    %v464 = vmul.f32 %v460, %v462
    %466 = vrot.lane.b32.xlu0 %v458, 64
    %v467 = vpop.permute.xlu0 %466
    %v469 = vmul.f32 %v460, %v467
    %471 = vrot.lane.b32.xlu0 %v469, 32
    %v472 = vpop.permute.xlu0 %471
    %v474 = vadd.f32 %v464, %v472
    %v475 = vtanh.pop %v474
    %477 = vrot.lane.b32.xlu0 %v475, 64
    %v478 = vpop.permute.xlu0 %477
    %v480 = vmul.f32 %v460, %v478
    %v481 = vld [vmem:[#allocation2 + $0x30] sm:$0xff]
    %v482 = vld [vmem:[#allocation2 + $0x38] sm:$0xff]
    %v483 = vld [vmem:[#allocation2 + $0x40] sm:$0xff]
    %v484 = vld [vmem:[#allocation2 + $0x48] sm:$0xff]
    %v485 = vld [vmem:[#allocation2 + $0x50] sm:$0x1]
    %v486 = vperm.slane %v485, 0
    %v488 = vrot.slane %v480, 6
    %489 = vrot.lane.b32.xlu0 %v488, 32
    %v490 = vpop.permute.xlu0 %489
    %v491 = vsel %vm70, %v490, 0
    %493 = vmatpush.msra.mxu0 0.0
    %494 = vmatpush.msra.mxu0 0.0
    %495 = vmatpush.msra.mxu0 0.0
    %496 = vmatpush.msra.mxu0 0.0
    %497 = vmatpush.msra.mxu0 0.0
    %498 = vmatpush.msra.mxu0 0.0
    %499 = vmatpush.msra.mxu0 0.0
    %500 = vmatpush.msra.mxu0 0.0
    %501 = vmatpush.msra.mxu0 0.0
    %502 = vmatpush.msra.mxu0 0.0
    %503 = vmatpush.msra.mxu0 0.0
    %504 = vmatpush.msra.mxu0 0.0
    %505 = vmatpush.msra.mxu0 %v484
    %506 = vmatpush.msra.mxu0 %v483
    %507 = vmatpush.msra.mxu0 %v482
    %508 = vmatpush.msra.mxu0 %v481
    %509 = vmatmul.f32.gmra.mxu0 %v491
    %v510 = vpop.f32.mrf.mxu0
    %v511 = vadd.f32 %v486, %v510
    %512 = vdwg.mxu0
    %v513 = vmax.f32 %v511, 0.0
    %v514 = vld [vmem:[#allocation2 + $0x58] sm:$0xff]
    %v515 = vld [vmem:[#allocation2 + $0x60] sm:$0xff]
    %v516 = vld [vmem:[#allocation2 + $0x68] sm:$0xff]
    %v517 = vld [vmem:[#allocation2 + $0x70] sm:$0xff]
    %v518 = vld [vmem:[#allocation2 + $0x78] sm:$0xff]
    %v519 = vld [vmem:[#allocation2 + $0x80] sm:$0xff]
    %v520 = vld [vmem:[#allocation2 + $0x88] sm:$0xff]
    %v521 = vld [vmem:[#allocation2 + $0x90] sm:$0xff]
    %v522 = vld [vmem:[#allocation2 + $0x98] sm:$0xff]
    %v523 = vld [vmem:[#allocation2 + $0xa0] sm:$0xff]
    %v524 = vld [vmem:[#allocation2 + $0xa8] sm:$0xff]
    %v525 = vld [vmem:[#allocation2 + $0xb0] sm:$0xff]
    %v526 = vld [vmem:[#allocation2 + $0xb8] sm:$0xff]
    %v527 = vld [vmem:[#allocation2 + $0xc0] sm:$0xff]
    %v528 = vld [vmem:[#allocation2 + $0xc8] sm:$0xff]
    %v529 = vld [vmem:[#allocation2 + $0xd0] sm:$0xff]
    %v530 = vld [vmem:[#allocation2 + $0xd8] sm:$0x1]
    %v531 = vperm.slane %v530, 0
    %532 = vmatpush.msra.mxu0 %v529
    %533 = vmatpush.msra.mxu0 %v528
    %534 = vmatpush.msra.mxu0 %v527
    %535 = vmatpush.msra.mxu0 %v526
    %536 = vmatpush.msra.mxu0 %v525
    %537 = vmatpush.msra.mxu0 %v524
    %538 = vmatpush.msra.mxu0 %v523
    %539 = vmatpush.msra.mxu0 %v522
    %540 = vmatpush.msra.mxu0 %v521
    %541 = vmatpush.msra.mxu0 %v520
    %542 = vmatpush.msra.mxu0 %v519
    %543 = vmatpush.msra.mxu0 %v518
    %544 = vmatpush.msra.mxu0 %v517
    %545 = vmatpush.msra.mxu0 %v516
    %546 = vmatpush.msra.mxu0 %v515
    %547 = vmatpush.msra.mxu0 %v514
    %548 = vmatmul.f32.gmra.mxu0 %v513
    %v549 = vpop.f32.mrf.mxu0
    %v550 = vadd.f32 %v531, %v549
    %551 = vdwg.mxu0
    %v552 = vmax.f32 %v550, 0.0
    %v553 = vld [vmem:[#allocation2 + $0xe0] sm:$0xff]
    %v554 = vld [vmem:[#allocation2 + $0xe8] sm:$0xff]
    %v555 = vld [vmem:[#allocation2 + $0xf0] sm:$0xff]
    %v556 = vld [vmem:[#allocation2 + $0xf8] sm:$0xff]
    %v557 = vld [vmem:[#allocation2 + $0x100] sm:$0xff]
    %v558 = vld [vmem:[#allocation2 + $0x108] sm:$0xff]
    %v559 = vld [vmem:[#allocation2 + $0x110] sm:$0xff]
    %v560 = vld [vmem:[#allocation2 + $0x118] sm:$0xff]
    %v561 = vld [vmem:[#allocation2 + $0x120] sm:$0xff]
    %v562 = vld [vmem:[#allocation2 + $0x128] sm:$0xff]
    %v563 = vld [vmem:[#allocation2 + $0x130] sm:$0xff]
    %v564 = vld [vmem:[#allocation2 + $0x138] sm:$0xff]
    %v565 = vld [vmem:[#allocation2 + $0x140] sm:$0xff]
    %v566 = vld [vmem:[#allocation2 + $0x148] sm:$0xff]
    %v567 = vld [vmem:[#allocation2 + $0x150] sm:$0xff]
    %v568 = vld [vmem:[#allocation2 + $0x158] sm:$0xff]
    %v569 = vld [vmem:[#allocation2 + $0x160] sm:$0x1]
    %v570 = vperm.slane %v569, 0
    %571 = vmatpush.msra.mxu0 %v568
    %572 = vmatpush.msra.mxu0 %v567
    %573 = vmatpush.msra.mxu0 %v566
    %574 = vmatpush.msra.mxu0 %v565
    %575 = vmatpush.msra.mxu0 %v564
    %576 = vmatpush.msra.mxu0 %v563
    %577 = vmatpush.msra.mxu0 %v562
    %578 = vmatpush.msra.mxu0 %v561
    %579 = vmatpush.msra.mxu0 %v560
    %580 = vmatpush.msra.mxu0 %v559
    %581 = vmatpush.msra.mxu0 %v558
    %582 = vmatpush.msra.mxu0 %v557
    %583 = vmatpush.msra.mxu0 %v556
    %584 = vmatpush.msra.mxu0 %v555
    %585 = vmatpush.msra.mxu0 %v554
    %586 = vmatpush.msra.mxu0 %v553
    %587 = vmatmul.f32.gmra.mxu0 %v552
    %v588 = vpop.f32.mrf.mxu0
    %v589 = vadd.f32 %v570, %v588
    %590 = vdwg.mxu0
    %591 = vst [vmem:[%s2] sm:$0x3] %v589
    // Predicated region
    $region14: #{lstm_model_forward.1} parent=1 // pred_check
      _
    $region15: #{lstm_model_forward.1} parent=1 // pred_check_branch
      %593 = sbr.rel (0) target = $region17
    $region16: #{lstm_model_forward.1} parent=1 // pred_region
      _
    $region17: #{lstm_model_forward.1} parent=1 // pred_fallthru
      _
    // Predicated region
    $region18: #{lstm_model_forward.1} parent=1 // pred_check
      _
    $region19: #{lstm_model_forward.1} parent=1 // pred_check_branch
      %595 = sbr.rel (0) target = $region21
    $region20: #{lstm_model_forward.1} parent=1 // pred_region
      _
    $region21: #{lstm_model_forward.1} parent=1 // pred_fallthru
      _
    %596 = vsyncpa [#allocation3], 1

</llo_original>
